<compile_context>
chip_gen: v7x
topology: tpu7x:2x2x1
jax: 0.10.0
libtpu: 0.0.40
codegen_flags: <defaults>
</compile_context>

<pallas_src>
import functools

import jax
import jax.numpy as jnp
from jax.experimental import pallas as pl
from jax.experimental.pallas import tpu as pltpu

EPS = 1e-8


def _round_up(n, m):
    return ((n + m - 1) // m) * m


def _twln_kernel(gamma_ref, beta_ref, x_ref, o_ref, *, inv_c, eps):
    # x_ref: (C_pad, tT) tile — batch dim squeezed away by the BlockSpec.
    x = x_ref[...].astype(jnp.float32)

    # Single-pass moments over the channel (sublane) axis: one sweep of the
    # tile through vregs.  Note: E[x^2] - mean^2 has mild cancellation risk for
    # data with mean >> std; fine for typical activations.
    s1 = jnp.sum(x, axis=0, keepdims=True)        # (1, tT)
    s2 = jnp.sum(x * x, axis=0, keepdims=True)    # (1, tT)
    mean = s1 * inv_c
    var = jnp.maximum(s2 * inv_c - mean * mean, 0.0)

    # Double-eps std exactly as in the PyTorch module.
    std = jnp.sqrt(var + eps) + eps               # (1, tT)
    inv_std = pl.reciprocal(std, approx=False)    # per-column: T ops, not C*T

    nx = (x - mean) * inv_std                     # (C_pad, tT)
    nx = nx * gamma_ref[...] + beta_ref[...]      # (C_pad, 1) broadcast on lanes
    o_ref[...] = nx.astype(o_ref.dtype)


def timewise_layer_norm(x, gamma, beta, eps=EPS):
    """x: (B, C, T); gamma, beta: (C,).  Returns (B, C, T) in x.dtype."""
    B, C, T = x.shape
    itemsize = jnp.dtype(x.dtype).itemsize

    # Sublane multiple: 8 for f32, 16 for bf16, 32 for int8.
    sub = max(8, 32 // itemsize)
    c_pad = _round_up(C, sub)

    # Lane-dense time tile: multiple of 128, <= 512, capped so the
    # double-buffered in+out working set stays ~<= 8 MiB (safe on v7x's 64 MiB).
    budget_bytes = 8 << 20
    max_tt = max(128, (budget_bytes // (4 * c_pad * itemsize)) // 128 * 128)
    t_tile = min(512, max_tt, _round_up(T, 128))
    t_pad = _round_up(T, t_tile)

    xp = x
    if c_pad != C or t_pad != T:
        xp = jnp.pad(x, ((0, 0), (0, c_pad - C), (0, t_pad - T)))
    gamma2d = jnp.pad(gamma.astype(jnp.float32), (0, c_pad - C)).reshape(c_pad, 1)
    beta2d = jnp.pad(beta.astype(jnp.float32), (0, c_pad - C)).reshape(c_pad, 1)

    kernel = functools.partial(_twln_kernel, inv_c=1.0 / C, eps=eps)

    out = pl.pallas_call(
        kernel,
        out_shape=jax.ShapeDtypeStruct((B, c_pad, t_pad), x.dtype),
        grid_spec=pltpu.PrefetchScalarGridSpec(
            num_scalar_prefetch=0,
            grid=(B, t_pad // t_tile),
            in_specs=[
                pl.BlockSpec((c_pad, 1), lambda b, t: (0, 0)),        # gamma
                pl.BlockSpec((c_pad, 1), lambda b, t: (0, 0)),        # beta
                # None => squeeze the leading batch dim: kernel sees (C_pad, tT).
                pl.BlockSpec((None, c_pad, t_tile), lambda b, t: (b, 0, t)),
            ],
            out_specs=pl.BlockSpec((None, c_pad, t_tile), lambda b, t: (b, 0, t)),
        ),
        compiler_params=pltpu.CompilerParams(
            dimension_semantics=("parallel", "parallel"),  # megacore-friendly
            vmem_limit_bytes=32 * 1024 * 1024,
        ),
    )(gamma2d, beta2d, xp)

    if c_pad != C or t_pad != T:
        out = out[:, :C, :T]
    return out


def _reference(x, gamma, beta, eps=EPS):
    # Pure-JAX mirror of the PyTorch forward (two-pass, exact divide).
    mean = jnp.mean(x, axis=1, keepdims=True)
    var = jnp.mean((x - mean) ** 2, axis=1, keepdims=True)
    std = jnp.sqrt(var + eps) + eps
    nx = (x - mean) / std
    return nx * gamma[None, :, None] + beta[None, :, None]


if __name__ == "__main__":
    key = jax.random.PRNGKey(0)
    k1, k2 = jax.random.split(key)

    # Small shape consistent with the module (input_size = C channels).
    B, C, T = 2, 8, 16
    x = jax.random.normal(k1, (B, C, T), dtype=jnp.float32)
    gamma = jnp.ones((C,), dtype=jnp.float32)
    beta = jnp.zeros((C,), dtype=jnp.float32)

    out = jax.block_until_ready(timewise_layer_norm(x, gamma, beta))
    ref = _reference(x, gamma, beta)
    assert out.shape == (B, C, T)
    assert jnp.allclose(out, ref, atol=1e-5, rtol=1e-5), "f32 mismatch vs reference"

    # Second shape: lane-dense (no padding path), bf16 on the HBM bus,
    # non-trivial affine parameters.
    B2, C2, T2 = 2, 64, 512
    x2 = jax.random.normal(k2, (B2, C2, T2), dtype=jnp.bfloat16)
    g2 = 1.0 + 0.1 * jax.random.normal(jax.random.PRNGKey(1), (C2,), dtype=jnp.float32)
    b2 = 0.1 * jax.random.normal(jax.random.PRNGKey(2), (C2,), dtype=jnp.float32)

    out2 = jax.block_until_ready(timewise_layer_norm(x2, g2, b2))
    ref2 = _reference(x2.astype(jnp.float32), g2, b2)
    assert out2.shape == (B2, C2, T2)
    assert jnp.allclose(out2.astype(jnp.float32), ref2, atol=3e-2, rtol=3e-2), \
        "bf16 mismatch vs reference"

    print("KERNEL_OK")
</pallas_src>

<mosaic_0001>
module attributes {stable_mosaic.version = 11 : i64} {
  func.func @_twln_kernel(%arg0: i32, %arg1: i32, %arg2: memref<8x1xf32, #tpu.memory_space<vmem>>, %arg3: memref<8x1xf32, #tpu.memory_space<vmem>>, %arg4: memref<1x8x128xf32, #tpu.memory_space<vmem>>, %arg5: memref<1x8x128xf32, #tpu.memory_space<vmem>>) attributes {dimension_semantics = [#tpu.dimension_semantics<parallel>, #tpu.dimension_semantics<parallel>], iteration_bounds = array<i64: 2, 1>, scalar_prefetch = 0 : i64, scratch_operands = 0 : i64, tpu.core_type = #tpu.core_type<tc>, window_params = [{pipeline_mode = #tpu.pipeline_mode<synchronous>, transform_indices = @transform_0, window_bounds = array<i64: 8, 1>}, {pipeline_mode = #tpu.pipeline_mode<synchronous>, transform_indices = @transform_1, window_bounds = array<i64: 8, 1>}, {transform_indices = @transform_2, window_bounds = array<i64: 1, 8, 128>}, {transform_indices = @transform_3, window_bounds = array<i64: 1, 8, 128>}]} {
    %c0 = arith.constant 0 : index
    %c0_0 = arith.constant 0 : index
    %c0_1 = arith.constant 0 : index
    %0 = vector.load %arg4[%c0, %c0_0, %c0_1] : memref<1x8x128xf32, #tpu.memory_space<vmem>>, vector<1x8x128xf32>
    %1 = vector.shape_cast %0 : vector<1x8x128xf32> to vector<8x128xf32>
    %cst = arith.constant dense<0.000000e+00> : vector<128xf32>
    %2 = vector.multi_reduction <add>, %1, %cst [0] : vector<8x128xf32> to vector<128xf32>
    %3 = vector.shape_cast %2 : vector<128xf32> to vector<1x128xf32>
    %4 = arith.mulf %1, %1 : vector<8x128xf32>
    %cst_2 = arith.constant dense<0.000000e+00> : vector<128xf32>
    %5 = vector.multi_reduction <add>, %4, %cst_2 [0] : vector<8x128xf32> to vector<128xf32>
    %6 = vector.shape_cast %5 : vector<128xf32> to vector<1x128xf32>
    %cst_3 = arith.constant 1.250000e-01 : f32
    %7 = vector.broadcast %cst_3 : f32 to vector<1x128xf32>
    %8 = arith.mulf %3, %7 : vector<1x128xf32>
    %cst_4 = arith.constant 1.250000e-01 : f32
    %9 = vector.broadcast %cst_4 : f32 to vector<1x128xf32>
    %10 = arith.mulf %6, %9 : vector<1x128xf32>
    %11 = arith.mulf %8, %8 : vector<1x128xf32>
    %12 = arith.subf %10, %11 : vector<1x128xf32>
    %cst_5 = arith.constant 0.000000e+00 : f32
    %13 = vector.broadcast %cst_5 : f32 to vector<1x128xf32>
    %14 = arith.maximumf %12, %13 : vector<1x128xf32>
    %cst_6 = arith.constant 9.99999993E-9 : f32
    %15 = vector.broadcast %cst_6 : f32 to vector<1x128xf32>
    %16 = arith.addf %14, %15 : vector<1x128xf32>
    %17 = math.sqrt %16 : vector<1x128xf32>
    %cst_7 = arith.constant 9.99999993E-9 : f32
    %18 = vector.broadcast %cst_7 : f32 to vector<1x128xf32>
    %19 = arith.addf %17, %18 : vector<1x128xf32>
    %20 = tpu.reciprocal %19 : vector<1x128xf32> -> vector<1x128xf32>
    %21 = vector.broadcast %8 : vector<1x128xf32> to vector<8x128xf32>
    %22 = arith.subf %1, %21 : vector<8x128xf32>
    %23 = vector.broadcast %20 : vector<1x128xf32> to vector<8x128xf32>
    %24 = arith.mulf %22, %23 : vector<8x128xf32>
    %c0_8 = arith.constant 0 : index
    %c0_9 = arith.constant 0 : index
    %25 = vector.load %arg2[%c0_8, %c0_9] : memref<8x1xf32, #tpu.memory_space<vmem>>, vector<8x1xf32>
    %26 = vector.broadcast %25 : vector<8x1xf32> to vector<8x128xf32>
    %27 = arith.mulf %24, %26 : vector<8x128xf32>
    %c0_10 = arith.constant 0 : index
    %c0_11 = arith.constant 0 : index
    %28 = vector.load %arg3[%c0_10, %c0_11] : memref<8x1xf32, #tpu.memory_space<vmem>>, vector<8x1xf32>
    %29 = vector.broadcast %28 : vector<8x1xf32> to vector<8x128xf32>
    %30 = arith.addf %27, %29 : vector<8x128xf32>
    %c0_12 = arith.constant 0 : index
    %c0_13 = arith.constant 0 : index
    %c0_14 = arith.constant 0 : index
    %31 = vector.load %arg5[%c0_12, %c0_13, %c0_14] : memref<1x8x128xf32, #tpu.memory_space<vmem>>, vector<1x8x128xf32>
    %32 = vector.shape_cast %31 : vector<1x8x128xf32> to vector<8x128xf32>
    %33 = vector.shape_cast %30 : vector<8x128xf32> to vector<1x8x128xf32>
    tpu.vector_store %arg5[%c0_12, %c0_13, %c0_14], %33 {strides = array<i32>} : memref<1x8x128xf32, #tpu.memory_space<vmem>>, vector<1x8x128xf32>,
    return
  }
  func.func @transform_0(%arg0: i32, %arg1: i32) -> (i32, i32) {
    %c0_i32 = arith.constant 0 : i32
    %c0_i32_0 = arith.constant 0 : i32
    %c0_i32_1 = arith.constant 0 : i32
    return %c0_i32, %c0_i32_0 : i32, i32
  }
  func.func @transform_1(%arg0: i32, %arg1: i32) -> (i32, i32) {
    %c0_i32 = arith.constant 0 : i32
    %c0_i32_0 = arith.constant 0 : i32
    %c0_i32_1 = arith.constant 0 : i32
    return %c0_i32, %c0_i32_0 : i32, i32
  }
  func.func @transform_2(%arg0: i32, %arg1: i32) -> (i32, i32, i32) {
    %c0_i32 = arith.constant 0 : i32
    %c0_i32_0 = arith.constant 0 : i32
    return %arg0, %c0_i32, %arg1 : i32, i32, i32
  }
  func.func @transform_3(%arg0: i32, %arg1: i32) -> (i32, i32, i32) {
    %c0_i32 = arith.constant 0 : i32
    %c0_i32_0 = arith.constant 0 : i32
    return %arg0, %c0_i32, %arg1 : i32, i32, i32
  }
}

</mosaic_0001>

<llo_original>
// kernel: tpu_custom_call.1
$region0: #{tpu_custom_call.1}
  #allocation0 [shape = 'u32[]', space=smem, size = 0x4, offset = 0x4, fixed_abs, tag = 'smem constant byte address 0x4 - core index']
  #allocation1 [shape = 'u32[144,128]{1,0:T(1,128)}', space=vmem, size = 0x12000, scoped, tag = 'internal scratch']
  %s0 = inlined_call_operand.vmem [shape: f32[8,1], index: 0, kind: input, shape index: {}]
  %s1 = inlined_call_operand.vmem [shape: f32[8,1], index: 1, kind: input, shape index: {}]
  %s2 = inlined_call_operand.vmem [shape: f32[2,8,128], index: 2, kind: input, shape index: {}]
  %s3 = inlined_call_operand.hbm [shape: f32[2,8,128], index: 3, kind: output, shape index: {}]
  %s4 = sld [smem:[#allocation0]]
  $region45: #{tpu_custom_call.1} parent=0
    _
  %s6 = ssub.s32 1, %s4
  %s7 = scalar_select 0, %s6, %s4
  $region1: #{tpu_custom_call.1} parent=0
    #allocation2 [shape = 'u8[8192]{0}', space=vmem, size = 0x2000, scoped, tag = 'output window, operand 0']
    #allocation3 [shape = 's32[2]{0}', space=sflag, size = 0x8, scoped, tag = 'scoped memory for tpu_custom_call.1']
    %8 = vsyncpa [#allocation3], 0
    %s9 = scalar_lea.sflag [#allocation3], 1
    %10 = vsyncpa %s9, 0
    loop: start=0, step=1, limit=4
    $region2: #{tpu_custom_call.1} parent=1 // loop_pre_header
      _
    $region3: #{tpu_custom_call.1} parent=1 // loop_header
      %s12 = sphi 0, %s16
      %p13 = scmp.ge.s32.totalorder %s12, 4
      %s19 = sphi 0, %s31
      %s20 = sphi 0, %s27
      %s21 = sphi 0, %s19
      %s22 = sphi 0, %s20
      %s23 = sphi 0, %s21
      %s24 = sphi 0, %s22
      %s32 = sphi 0, %s32
      %s34 = sphi 0, %s32
      %s35 = sphi 0, %s34
      %s49 = sphi 0, %s35
      %s53 = sphi 0, %s53
      %s55 = sphi 0, %s53
      %s56 = sphi 0, %s55
      %s70 = sphi 0, %s56
      %s78 = sphi 0, %s80
      %s81 = sphi 0, %s78
      %s82 = sphi 0, %s81
      %s98 = sphi 0, %s82
      %s106 = sphi 0, %s108
      %s109 = sphi 0, %s106
      %s110 = sphi 0, %s109
      %s126 = sphi 0, %s110
    $region4: #{tpu_custom_call.1} parent=1 // loop_header_branch
      %15 = sbr.rel (%p13) target = $region8
    $region5: #{tpu_custom_call.1} parent=1 // loop_body
      %s17 = ssub.s32 %s12, 1
      %s18 = ssub.s32 %s12, 2
      %s25 = sadd.s32 1, %s20
      %p26 = scmp.ge.s32.totalorder %s25, 1
      %s27 = scalar_select %p26, 0, %s25
      %s28 = sadd.s32 1, %s19
      %s29 = scalar_select %p26, %s28, %s19
      %p30 = scmp.ge.s32.totalorder %s29, 2
      %s31 = scalar_select %p30, 0, %s29
      %s33 = sadd.s32 %s32, 1
      %p36 = scmp.eq.s32.totalorder %s12, 1
      %p37 = scmp.ne.s32.totalorder %s32, %s34
      %p38 = scmp.eq.s32.totalorder %s12, 0
      %p39 = por %p37, %p38
      %p40 = scmp.ne.s32.totalorder %s32, %s34
      %p41 = scmp.eq.s32.totalorder %s17, 1
      %p42 = por %p40, %p41
      %p43 = scmp.ne.s32.totalorder %s34, %s35
      %p44 = scmp.eq.s32.totalorder %s17, 0
      %p45 = por %p43, %p44
      %p46 = scmp.ne.s32.totalorder %s34, %s35
      %p47 = scmp.eq.s32.totalorder %s18, 1
      %p48 = por %p46, %p47
      %p50 = scmp.ne.s32.totalorder %s35, %s49
      %p51 = scmp.eq.s32.totalorder %s18, 0
      %p52 = por %p50, %p51
      %s54 = sadd.s32 %s53, 1
      %p57 = scmp.eq.s32.totalorder %s12, 1
      %p58 = scmp.ne.s32.totalorder %s53, %s55
      %p59 = scmp.eq.s32.totalorder %s12, 0
      %p60 = por %p58, %p59
      %p61 = scmp.ne.s32.totalorder %s53, %s55
      %p62 = scmp.eq.s32.totalorder %s17, 1
      %p63 = por %p61, %p62
      %p64 = scmp.ne.s32.totalorder %s55, %s56
      %p65 = scmp.eq.s32.totalorder %s17, 0
      %p66 = por %p64, %p65
      %p67 = scmp.ne.s32.totalorder %s55, %s56
      %p68 = scmp.eq.s32.totalorder %s18, 1
      %p69 = por %p67, %p68
      %p71 = scmp.ne.s32.totalorder %s56, %s70
      %p72 = scmp.eq.s32.totalorder %s18, 0
      %p73 = por %p71, %p72
      %s74 = ssub.s32 %s19, %s31
      %s75 = ssub.s32 %s20, %s27
      %s76 = sor.u32 %s74, %s75
      %p77 = scmp.eq.s32.totalorder %s76, 0
      %s79 = sadd.s32 %s78, 1
      %s80 = scalar_select %p77, %s78, %s79
      %p83 = pneg %p77
      %p84 = scmp.eq.s32.totalorder %s12, 1
      %p85 = por %p83, %p84
      %p86 = scmp.ne.s32.totalorder %s78, %s81
      %p87 = scmp.eq.s32.totalorder %s12, 0
      %p88 = por %p86, %p87
      %p89 = scmp.ne.s32.totalorder %s78, %s81
      %p90 = scmp.eq.s32.totalorder %s17, 1
      %p91 = por %p89, %p90
      %p92 = scmp.ne.s32.totalorder %s81, %s82
      %p93 = scmp.eq.s32.totalorder %s17, 0
      %p94 = por %p92, %p93
      %p95 = scmp.ne.s32.totalorder %s81, %s82
      %p96 = scmp.eq.s32.totalorder %s18, 1
      %p97 = por %p95, %p96
      %p99 = scmp.ne.s32.totalorder %s82, %s98
      %p100 = scmp.eq.s32.totalorder %s18, 0
      %p101 = por %p99, %p100
      %s102 = ssub.s32 %s19, %s31
      %s103 = ssub.s32 %s20, %s27
      %s104 = sor.u32 %s102, %s103
      %p105 = scmp.eq.s32.totalorder %s104, 0
      %s107 = sadd.s32 %s106, 1
      %s108 = scalar_select %p105, %s106, %s107
      %p111 = pneg %p105
      %p112 = scmp.eq.s32.totalorder %s12, 1
      %p113 = por %p111, %p112
      %p114 = scmp.ne.s32.totalorder %s106, %s109
      %p115 = scmp.eq.s32.totalorder %s12, 0
      %p116 = por %p114, %p115
      %p117 = scmp.ne.s32.totalorder %s106, %s109
      %p118 = scmp.eq.s32.totalorder %s17, 1
      %p119 = por %p117, %p118
      %p120 = scmp.ne.s32.totalorder %s109, %s110
      %p121 = scmp.eq.s32.totalorder %s17, 0
      %p122 = por %p120, %p121
      %p123 = scmp.ne.s32.totalorder %s109, %s110
      %p124 = scmp.eq.s32.totalorder %s18, 1
      %p125 = por %p123, %p124
      %p127 = scmp.ne.s32.totalorder %s110, %s126
      %p128 = scmp.eq.s32.totalorder %s18, 0
      %p129 = por %p127, %p128
      %p130 = scmp.le.s32.totalorder 1, %s12
      %p131 = scmp.lt.s32.totalorder %s12, 3
      %p132 = pnand %p130, %p131
      %p133 = pneg %p132
      // Predicated region
      $region9: #{tpu_custom_call.1} parent=5 // pred_check
        _
      $region10: #{tpu_custom_call.1} parent=5 // pred_check_branch
        %135 = sbr.rel (%p132) target = $region12
      $region11: #{tpu_custom_call.1} parent=5 // pred_region
        %s136 = ssub.s32 %s12, 1
        // Predicated region
        $region13: #{tpu_custom_call.1} parent=11 // pred_check
          %p137 = pneg %p45
        $region14: #{tpu_custom_call.1} parent=11 // pred_check_branch
          %139 = sbr.rel (%p137) target = $region16
        $region15: #{tpu_custom_call.1} parent=11 // pred_region
          _
        $region16: #{tpu_custom_call.1} parent=11 // pred_fallthru
          _
        // Predicated region
        $region17: #{tpu_custom_call.1} parent=11 // pred_check
          %p140 = pneg %p66
        $region18: #{tpu_custom_call.1} parent=11 // pred_check_branch
          %142 = sbr.rel (%p140) target = $region20
        $region19: #{tpu_custom_call.1} parent=11 // pred_region
          _
        $region20: #{tpu_custom_call.1} parent=11 // pred_fallthru
          _
      $region12: #{tpu_custom_call.1} parent=5 // pred_fallthru
        _
      %p143 = scmp.lt.s32.totalorder %s12, 2
      // Predicated region
      $region21: #{tpu_custom_call.1} parent=5 // pred_check
        %p144 = pneg %p143
      $region22: #{tpu_custom_call.1} parent=5 // pred_check_branch
        %146 = sbr.rel (%p144) target = $region24
      $region23: #{tpu_custom_call.1} parent=5 // pred_region
        // Predicated region
        $region25: #{tpu_custom_call.1} parent=23 // pred_check
          %p147 = pneg %p88
        $region26: #{tpu_custom_call.1} parent=23 // pred_check_branch
          %149 = sbr.rel (%p147) target = $region28
        $region27: #{tpu_custom_call.1} parent=23 // pred_region
          %p150 = scmp.lt.s32.totalorder %s19, 1
          %s151 = scalar_select %p150, %s19, 1
          %p152 = scmp.lt.s32.totalorder %s20, 0
          %s153 = scalar_select %p152, %s20, 0
          %s154 = sadd.s32 %s153, %s151
          %s155 = smul.addr %s154, 8
          %s156 = scalar_lea.vmem %s2, %s155
        $region28: #{tpu_custom_call.1} parent=23 // pred_fallthru
          _
      $region24: #{tpu_custom_call.1} parent=5 // pred_fallthru
        _
      %p157 = scmp.le.s32.totalorder 1, %s12
      %p158 = scmp.lt.s32.totalorder %s12, 3
      %p159 = pnand %p157, %p158
      %p160 = pneg %p159
      // Predicated region
      $region29: #{tpu_custom_call.1} parent=5 // pred_check
        _
      $region30: #{tpu_custom_call.1} parent=5 // pred_check_branch
        %162 = sbr.rel (%p159) target = $region32
      $region31: #{tpu_custom_call.1} parent=5 // pred_region
        %s163 = ssub.s32 %s12, 1
        %p164 = pneg %p45
        %p165 = pneg %p42
        %p166 = pneg %p66
        %p167 = pneg %p63
        %p168 = scmp.lt.s32.totalorder %s21, 1
        %s169 = scalar_select %p168, %s21, 1
        %p170 = scmp.lt.s32.totalorder %s22, 0
        %s171 = scalar_select %p170, %s22, 0
        %s172 = sadd.s32 %s171, %s169
        %s173 = smul.addr %s172, 8
        %s174 = scalar_lea.vmem %s2, %s173
        %p175 = pneg %p94
        %p176 = pneg %p91
        %p177 = pneg %p122
        %p178 = pneg %p119
        %s179 = sand.u32 %s109, 1
        %s180 = scalar_lea.sflag [#allocation3], %s179
        %s181 = sand.u32 %s109, 1
        %s182 = smul.addr %s181, 8
        %s183 = scalar_lea.vmem [#allocation2], %s182
        %p184 = scmp.lt.s32.totalorder %s21, 1
        %s185 = scalar_select %p184, %s21, 1
        %p186 = scmp.lt.s32.totalorder %s22, 0
        %s187 = scalar_select %p186, %s22, 0
        %s188 = sadd.s32 %s187, %s185
        %s189 = smul.addr %s188, 8
        %s190 = scalar_lea.vmem %s2, %s189
        %v191 = vld [vmem:[%s190] sm:$0xff]
        %v192 = vrot.slane %v191, 4
        %v193 = vadd.f32 %v191, %v192
        %v194 = vrot.slane %v193, 2
        %v195 = vadd.f32 %v193, %v194
        %v196 = vrot.slane %v195, 1
        %v197 = vadd.f32 %v195, %v196
        %v198 = vmul.f32 %v191, %v191
        %v199 = vrot.slane %v198, 4
        %v200 = vadd.f32 %v198, %v199
        %v201 = vrot.slane %v200, 2
        %v202 = vadd.f32 %v200, %v201
        %v203 = vrot.slane %v202, 1
        %v204 = vadd.f32 %v202, %v203
        %v205 = vmul.f32 %v197, 0.125
        %v206 = vmul.f32 %v204, 0.125
        %v207 = vmul.f32 %v205, %v205
        %v208 = vsub.f32 %v206, %v207
        %v209 = vmax.f32 %v208, 0.0
        %v210 = vadd.f32 %v209, 1e-08
        %v211 = vrsqrt.pop %v210
        %v212 = vmul.f32 %v210, %v211
        %vm213 = vcmp.eq.f32.partialorder %v210, inf
        %v214 = vsel %vm213, %v210, %v212
        %vm215 = vcmp.eq.f32.partialorder %v210, 0.0
        %v216 = vand.u32 %v210, 2147483648
        %v217 = vsel %vm215, %v216, %v214
        %v218 = vadd.f32 %v217, 1e-08
        %v219 = vrcp.pop %v218
        %v220 = vsub.f32 %v191, %v205
        %v221 = vmul.f32 %v220, %v219
        %v222 = vld [vmem:[%s0] sm:$0xff]
        %224 = vset.pattern.permute.xlu0 0
        %225 = vperm.xlu0 %224, %v222
        %v226 = vpop.permute.xlu0 %225
        %v228 = vmul.f32 %v221, %v226
        %v229 = vld [vmem:[%s1] sm:$0xff]
        %231 = vset.pattern.permute.xlu0 0
        %232 = vperm.xlu0 %231, %v229
        %v233 = vpop.permute.xlu0 %232
        %v235 = vadd.f32 %v228, %v233
        %236 = vst [vmem:[%s183] sm:$0xff] %v235
        %s237 = sand.u32 %s109, 1
        %s238 = scalar_lea.sflag [#allocation3], %s237
        %s239 = sand.u32 %s109, 1
        %s240 = smul.addr %s239, 8
        %s241 = scalar_lea.vmem [#allocation2], %s240
        // Predicated region
        $region33: #{tpu_custom_call.1} parent=31 // pred_check
          %p242 = pneg %p119
        $region34: #{tpu_custom_call.1} parent=31 // pred_check_branch
          %244 = sbr.rel (%p242) target = $region36
        $region35: #{tpu_custom_call.1} parent=31 // pred_region
          %s246 = ssub.s32 128, 128
          %247 = vsyncadd %s238, %s246
          %s248 = sadd.s32 %s22, %s21
          %s249 = smul.addr %s248, 128
          %s250 = scalar_lea.hbm %s3, %s249
          %s252 = sshll.u32 %s241, 4
          %s253 = int_to_ptr.vmem [resolvable:$true] %s252
          %255 = dma.vmem_to_hbm [thread:$0]  %s253, 128, %s250, %s238
        $region36: #{tpu_custom_call.1} parent=31 // pred_fallthru
          _
      $region32: #{tpu_custom_call.1} parent=5 // pred_fallthru
        _
      %p256 = scmp.le.s32.totalorder 2, %s12
      // Predicated region
      $region37: #{tpu_custom_call.1} parent=5 // pred_check
        %p257 = pneg %p256
      $region38: #{tpu_custom_call.1} parent=5 // pred_check_branch
        %259 = sbr.rel (%p257) target = $region40
      $region39: #{tpu_custom_call.1} parent=5 // pred_region
        %s260 = ssub.s32 %s12, 2
        // Predicated region
        $region41: #{tpu_custom_call.1} parent=39 // pred_check
          %p261 = pneg %p125
        $region42: #{tpu_custom_call.1} parent=39 // pred_check_branch
          %263 = sbr.rel (%p261) target = $region44
        $region43: #{tpu_custom_call.1} parent=39 // pred_region
          %s264 = sand.u32 %s110, 1
          %s265 = scalar_lea.sflag [#allocation3], %s264
          %s266 = sand.u32 %s110, 1
          %s267 = smul.addr %s266, 8
          %s268 = scalar_lea.vmem [#allocation2], %s267
          %269 = dma.done %s265, 128
        $region44: #{tpu_custom_call.1} parent=39 // pred_fallthru
          _
      $region40: #{tpu_custom_call.1} parent=5 // pred_fallthru
        _
    $region6: #{tpu_custom_call.1} parent=1 // loop_footer
      %s16 = sadd.s32 1, %s12
    $region7: #{tpu_custom_call.1} parent=1 // loop_footer_branch
      %11 = sbr.rel target = $region3
    $region8: #{tpu_custom_call.1} parent=1 // loop_exit
      _
    %270 = vsyncpa [#allocation3], 1
    %s271 = scalar_lea.sflag [#allocation3], 1
    %272 = vsyncpa %s271, 1

</llo_original>
